<compile_context>
chip_gen: v7x
topology: tpu7x:2x2x1
jax: 0.10.0
libtpu: 0.0.40
codegen_flags: <defaults>
</compile_context>

<pallas_src>
import jax
import jax.numpy as jnp
from jax.experimental import pallas as pl
from jax.experimental.pallas import tpu as pltpu


def resnet_block_kernel(xt_ref,                       # (Lt=2*Lp+1, Cp) one batch element
                        s1_ref, t1_ref, w1_ref, cb1_ref,
                        s2_ref, t2_ref, w2_ref, cb2_ref,
                        out_ref):                     # (Lp, Cp)
    Lp, Cp = out_ref.shape

    # ---- max-pool: window 3, stride 2, over the already zero-padded sequence ----
    # strided sublane reads straight from the VMEM tile (no extra copies)
    a = xt_ref[pl.ds(0, Lp, stride=2), :]             # xt[2l]
    b = xt_ref[pl.ds(1, Lp, stride=2), :]             # xt[2l+1]
    c = xt_ref[pl.ds(2, Lp, stride=2), :]             # xt[2l+2]
    sc = jnp.maximum(a, jnp.maximum(b, c))            # (Lp, Cp) shortcut

    def bn_relu(x, s_ref, t_ref):
        # eval-mode BN folded to per-channel scale/shift, then ReLU
        return jnp.maximum(x * s_ref[...] + t_ref[...], 0.0)

    def shift_rows(x, direction):
        # direction=+1: out[l] = x[l-1], out[0] = 0
        # direction=-1: out[l] = x[l+1], out[Lp-1] = 0
        n = x.shape[0]
        rolled = pltpu.roll(x, shift=direction % n, axis=0)      # XLU sublane rotate
        row = jax.lax.broadcasted_iota(jnp.int32, x.shape, 0)
        keep = (row >= direction) if direction > 0 else (row < n + direction)
        return jnp.where(keep, rolled, 0.0)

    def conv3(h, w_ref, b_ref):
        # Conv1d(k=3, padding=1) as a single im2col matmul:
        #   [h[l-1] | h[l] | h[l+1]] (Lp, 3*Cp)  @  W_cat (3*Cp, Cp)
        hcat = jnp.concatenate([shift_rows(h, 1), h, shift_rows(h, -1)], axis=-1)
        y = jnp.dot(hcat, w_ref[...], preferred_element_type=jnp.float32)
        return y + b_ref[...]

    h = conv3(bn_relu(sc, s1_ref, t1_ref), w1_ref, cb1_ref)
    h = conv3(bn_relu(h, s2_ref, t2_ref), w2_ref, cb2_ref)
    out_ref[...] = h + sc


def resnet_block_pallas(x, params, *, eps=1e-5):
    """x: (N, C, L) float32 -- PyTorch NCL layout. Returns (N, C, Lp)."""
    N, C, L = x.shape
    Lp = (L - 2) // 2 + 1
    Lt = 2 * Lp + 1                                   # pooled input length actually read
    Cp = ((C + 127) // 128) * 128                     # lane-dense channel padding

    # ---- wrapper glue: one transpose + one pad (length pad for ConstantPad1d(0,1)
    #      and channel pad to Cp, folded into a single jnp.pad) ----
    xt = jnp.transpose(x, (0, 2, 1))                  # (N, L, C)
    xt = jnp.pad(xt, ((0, 0), (0, Lt - L), (0, Cp - C)))          # (N, Lt, Cp)

    def fold_bn(gamma, beta, mean, var):
        s = gamma / jnp.sqrt(var + eps)
        t = beta - mean * s
        return (jnp.pad(s, (0, Cp - C)).reshape(1, Cp),
                jnp.pad(t, (0, Cp - C)).reshape(1, Cp))

    def fold_conv(W, bias):
        # torch (C_out, C_in, 3) -> im2col weight (3*Cp, Cp); rows k*Cp:(k+1)*Cp = W[:,:,k].T
        w = jnp.transpose(W, (2, 1, 0))                           # (3, C_in, C_out)
        w = jnp.pad(w, ((0, 0), (0, Cp - C), (0, Cp - C)))
        return (w.reshape(3 * Cp, Cp),
                jnp.pad(bias, (0, Cp - C)).reshape(1, Cp))

    s1, t1 = fold_bn(*params["bn1"])
    s2, t2 = fold_bn(*params["bn2"])
    w1, cb1 = fold_conv(params["W1"], params["b1"])
    w2, cb2 = fold_conv(params["W2"], params["b2"])

    # grid over the batch dimension; whole (Lt, Cp) sequence per step (DPCNN sequences
    # shrink with depth, so this fits VMEM comfortably even for realistic sizes).
    act_in = pl.BlockSpec((None, Lt, Cp), lambda i: (i, 0, 0))    # batch dim squeezed
    act_out = pl.BlockSpec((None, Lp, Cp), lambda i: (i, 0, 0))

    def resident(shape):
        return pl.BlockSpec(shape, lambda i: (0, 0))              # stays in VMEM across grid

    out_nlc = pl.pallas_call(
        resnet_block_kernel,
        out_shape=jax.ShapeDtypeStruct((N, Lp, Cp), jnp.float32),
        grid=(N,),
        in_specs=[act_in,
                  resident((1, Cp)), resident((1, Cp)), resident((3 * Cp, Cp)), resident((1, Cp)),
                  resident((1, Cp)), resident((1, Cp)), resident((3 * Cp, Cp)), resident((1, Cp))],
        out_specs=act_out,
        compiler_params=pltpu.CompilerParams(
            dimension_semantics=("parallel",),        # 2 TCs on v7x split the batch
            vmem_limit_bytes=48 * 1024 * 1024,        # headroom vs v7x 64 MiB physical VMEM
        ),
    )(xt, s1, t1, w1, cb1, s2, t2, w2, cb2)

    # back to PyTorch NCL layout, dropping the padded channels
    return jnp.transpose(out_nlc[:, :, :C], (0, 2, 1))            # (N, C, Lp)


def resnet_block_reference(x, params):
    """Pure-JAX reference mirroring the PyTorch module (eval-mode BN)."""
    eps = 1e-5
    xp = jnp.pad(x, ((0, 0), (0, 0), (0, 1)))
    sc = jax.lax.reduce_window(xp, -jnp.inf, jax.lax.max,
                               (1, 1, 3), (1, 1, 2), "VALID")

    def bn(h, gamma, beta, mean, var):
        return ((h - mean[None, :, None]) / jnp.sqrt(var[None, :, None] + eps)
                * gamma[None, :, None] + beta[None, :, None])

    def conv(h, W, bias):
        y = jax.lax.conv_general_dilated(h, W, (1,), [(1, 1)],
                                         dimension_numbers=("NCH", "OIH", "NCH"))
        return y + bias[None, :, None]

    h = jax.nn.relu(bn(sc, *params["bn1"]))
    h = conv(h, params["W1"], params["b1"])
    h = jax.nn.relu(bn(h, *params["bn2"]))
    h = conv(h, params["W2"], params["b2"])
    return h + sc


if __name__ == "__main__":
    N, C, L = 2, 32, 16   # small shapes consistent with the 1-D DPCNN block

    key = jax.random.PRNGKey(0)
    keys = jax.random.split(key, 13)

    def bn_params(k0, k1, k2, k3):
        gamma = jax.random.uniform(k0, (C,), jnp.float32, 0.5, 1.5)
        beta = 0.1 * jax.random.normal(k1, (C,), jnp.float32)
        mean = 0.1 * jax.random.normal(k2, (C,), jnp.float32)
        var = jax.random.uniform(k3, (C,), jnp.float32, 0.5, 1.5)
        return (gamma, beta, mean, var)

    params = {
        "bn1": bn_params(keys[0], keys[1], keys[2], keys[3]),
        "W1": 0.1 * jax.random.normal(keys[4], (C, C, 3), jnp.float32),
        "b1": 0.1 * jax.random.normal(keys[5], (C,), jnp.float32),
        "bn2": bn_params(keys[6], keys[7], keys[8], keys[9]),
        "W2": 0.1 * jax.random.normal(keys[10], (C, C, 3), jnp.float32),
        "b2": 0.1 * jax.random.normal(keys[11], (C,), jnp.float32),
    }

    x = jax.random.normal(keys[12], (N, C, L), jnp.float32)

    out = jax.block_until_ready(resnet_block_pallas(x, params))
    ref = jax.block_until_ready(resnet_block_reference(x, params))

    assert out.shape == (N, C, (L - 2) // 2 + 1), out.shape
    assert jnp.allclose(out, ref, atol=1e-4, rtol=1e-4), float(jnp.max(jnp.abs(out - ref)))

    print("KERNEL_OK")
</pallas_src>

<mosaic_0001>
module attributes {stable_mosaic.version = 11 : i64} {
  func.func @resnet_block_kernel(%arg0: i32, %arg1: memref<1x17x128xf32, #tpu.memory_space<vmem>>, %arg2: memref<1x128xf32, #tpu.memory_space<vmem>>, %arg3: memref<1x128xf32, #tpu.memory_space<vmem>>, %arg4: memref<384x128xf32, #tpu.memory_space<vmem>>, %arg5: memref<1x128xf32, #tpu.memory_space<vmem>>, %arg6: memref<1x128xf32, #tpu.memory_space<vmem>>, %arg7: memref<1x128xf32, #tpu.memory_space<vmem>>, %arg8: memref<384x128xf32, #tpu.memory_space<vmem>>, %arg9: memref<1x128xf32, #tpu.memory_space<vmem>>, %arg10: memref<1x8x128xf32, #tpu.memory_space<vmem>>) attributes {dimension_semantics = [#tpu.dimension_semantics<parallel>], iteration_bounds = array<i64: 2>, scalar_prefetch = 0 : i64, scratch_operands = 0 : i64, tpu.core_type = #tpu.core_type<tc>, window_params = [{transform_indices = @transform_0, window_bounds = array<i64: 1, 17, 128>}, {pipeline_mode = #tpu.pipeline_mode<synchronous>, transform_indices = @transform_1, window_bounds = array<i64: 1, 128>}, {pipeline_mode = #tpu.pipeline_mode<synchronous>, transform_indices = @transform_2, window_bounds = array<i64: 1, 128>}, {pipeline_mode = #tpu.pipeline_mode<synchronous>, transform_indices = @transform_3, window_bounds = array<i64: 384, 128>}, {pipeline_mode = #tpu.pipeline_mode<synchronous>, transform_indices = @transform_4, window_bounds = array<i64: 1, 128>}, {pipeline_mode = #tpu.pipeline_mode<synchronous>, transform_indices = @transform_5, window_bounds = array<i64: 1, 128>}, {pipeline_mode = #tpu.pipeline_mode<synchronous>, transform_indices = @transform_6, window_bounds = array<i64: 1, 128>}, {pipeline_mode = #tpu.pipeline_mode<synchronous>, transform_indices = @transform_7, window_bounds = array<i64: 384, 128>}, {pipeline_mode = #tpu.pipeline_mode<synchronous>, transform_indices = @transform_8, window_bounds = array<i64: 1, 128>}, {transform_indices = @transform_9, window_bounds = array<i64: 1, 8, 128>}]} {
    %c0 = arith.constant 0 : index
    %c0_0 = arith.constant 0 : index
    %c0_1 = arith.constant 0 : index
    %0 = tpu.strided_load %arg1[%c0, %c0_0, %c0_1] {strides = array<i32: 1, 2, 1>} : memref<1x17x128xf32, #tpu.memory_space<vmem>>, vector<1x8x128xf32>
    %1 = vector.shape_cast %0 : vector<1x8x128xf32> to vector<8x128xf32>
    %c0_2 = arith.constant 0 : index
    %c1 = arith.constant 1 : index
    %c0_3 = arith.constant 0 : index
    %2 = tpu.strided_load %arg1[%c0_2, %c1, %c0_3] {strides = array<i32: 1, 2, 1>} : memref<1x17x128xf32, #tpu.memory_space<vmem>>, vector<1x8x128xf32>
    %3 = vector.shape_cast %2 : vector<1x8x128xf32> to vector<8x128xf32>
    %c0_4 = arith.constant 0 : index
    %c2 = arith.constant 2 : index
    %c0_5 = arith.constant 0 : index
    %4 = tpu.strided_load %arg1[%c0_4, %c2, %c0_5] {strides = array<i32: 1, 2, 1>} : memref<1x17x128xf32, #tpu.memory_space<vmem>>, vector<1x8x128xf32>
    %5 = vector.shape_cast %4 : vector<1x8x128xf32> to vector<8x128xf32>
    %6 = arith.maximumf %3, %5 : vector<8x128xf32>
    %7 = arith.maximumf %1, %6 : vector<8x128xf32>
    %c0_6 = arith.constant 0 : index
    %c0_7 = arith.constant 0 : index
    %8 = vector.load %arg2[%c0_6, %c0_7] : memref<1x128xf32, #tpu.memory_space<vmem>>, vector<1x128xf32>
    %9 = vector.broadcast %8 : vector<1x128xf32> to vector<8x128xf32>
    %10 = arith.mulf %7, %9 : vector<8x128xf32>
    %c0_8 = arith.constant 0 : index
    %c0_9 = arith.constant 0 : index
    %11 = vector.load %arg3[%c0_8, %c0_9] : memref<1x128xf32, #tpu.memory_space<vmem>>, vector<1x128xf32>
    %12 = vector.broadcast %11 : vector<1x128xf32> to vector<8x128xf32>
    %13 = arith.addf %10, %12 : vector<8x128xf32>
    %cst = arith.constant 0.000000e+00 : f32
    %14 = vector.broadcast %cst : f32 to vector<8x128xf32>
    %15 = arith.maximumf %13, %14 : vector<8x128xf32>
    %c1_i32 = arith.constant 1 : i32
    %16 = tpu.dynamic_rotate %15 by %c1_i32 dim 0 : vector<8x128xf32>, i32 -> vector<8x128xf32>
    %17 = tpu.iota {dimensions = array<i32: 0>} : vector<8x128xi32>
    %c1_i32_10 = arith.constant 1 : i32
    %18 = vector.broadcast %c1_i32_10 : i32 to vector<8x128xi32>
    %19 = arith.cmpi sge, %17, %18 : vector<8x128xi32>
    %cst_11 = arith.constant 0.000000e+00 : f32
    %20 = vector.broadcast %cst_11 : f32 to vector<8x128xf32>
    %21 = arith.select %19, %16, %20 : vector<8x128xi1>, vector<8x128xf32>
    %c7_i32 = arith.constant 7 : i32
    %22 = tpu.dynamic_rotate %15 by %c7_i32 dim 0 : vector<8x128xf32>, i32 -> vector<8x128xf32>
    %23 = tpu.iota {dimensions = array<i32: 0>} : vector<8x128xi32>
    %c7_i32_12 = arith.constant 7 : i32
    %24 = vector.broadcast %c7_i32_12 : i32 to vector<8x128xi32>
    %25 = arith.cmpi slt, %23, %24 : vector<8x128xi32>
    %cst_13 = arith.constant 0.000000e+00 : f32
    %26 = vector.broadcast %cst_13 : f32 to vector<8x128xf32>
    %27 = arith.select %25, %22, %26 : vector<8x128xi1>, vector<8x128xf32>
    %28 = tpu.concatenate %21, %15, %27 in 1 : vector<8x128xf32>, vector<8x128xf32>, vector<8x128xf32> -> vector<8x384xf32>
    %c0_14 = arith.constant 0 : index
    %c0_15 = arith.constant 0 : index
    %29 = vector.load %arg4[%c0_14, %c0_15] : memref<384x128xf32, #tpu.memory_space<vmem>>, vector<384x128xf32>
    %cst_16 = arith.constant dense<0.000000e+00> : vector<8x128xf32>
    %30 = tpu.matmul %28, %29, %cst_16 {dimension_numbers = #tpu.dot_dimension_numbers<[1], [0], [0], [1], [0, 0, 1, 1], [], []>} : vector<8x384xf32>, vector<384x128xf32>, vector<8x128xf32> -> vector<8x128xf32>
    %c0_17 = arith.constant 0 : index
    %c0_18 = arith.constant 0 : index
    %31 = vector.load %arg5[%c0_17, %c0_18] : memref<1x128xf32, #tpu.memory_space<vmem>>, vector<1x128xf32>
    %32 = vector.broadcast %31 : vector<1x128xf32> to vector<8x128xf32>
    %33 = arith.addf %30, %32 : vector<8x128xf32>
    %c0_19 = arith.constant 0 : index
    %c0_20 = arith.constant 0 : index
    %34 = vector.load %arg6[%c0_19, %c0_20] : memref<1x128xf32, #tpu.memory_space<vmem>>, vector<1x128xf32>
    %35 = vector.broadcast %34 : vector<1x128xf32> to vector<8x128xf32>
    %36 = arith.mulf %33, %35 : vector<8x128xf32>
    %c0_21 = arith.constant 0 : index
    %c0_22 = arith.constant 0 : index
    %37 = vector.load %arg7[%c0_21, %c0_22] : memref<1x128xf32, #tpu.memory_space<vmem>>, vector<1x128xf32>
    %38 = vector.broadcast %37 : vector<1x128xf32> to vector<8x128xf32>
    %39 = arith.addf %36, %38 : vector<8x128xf32>
    %cst_23 = arith.constant 0.000000e+00 : f32
    %40 = vector.broadcast %cst_23 : f32 to vector<8x128xf32>
    %41 = arith.maximumf %39, %40 : vector<8x128xf32>
    %c1_i32_24 = arith.constant 1 : i32
    %42 = tpu.dynamic_rotate %41 by %c1_i32_24 dim 0 : vector<8x128xf32>, i32 -> vector<8x128xf32>
    %43 = tpu.iota {dimensions = array<i32: 0>} : vector<8x128xi32>
    %c1_i32_25 = arith.constant 1 : i32
    %44 = vector.broadcast %c1_i32_25 : i32 to vector<8x128xi32>
    %45 = arith.cmpi sge, %43, %44 : vector<8x128xi32>
    %cst_26 = arith.constant 0.000000e+00 : f32
    %46 = vector.broadcast %cst_26 : f32 to vector<8x128xf32>
    %47 = arith.select %45, %42, %46 : vector<8x128xi1>, vector<8x128xf32>
    %c7_i32_27 = arith.constant 7 : i32
    %48 = tpu.dynamic_rotate %41 by %c7_i32_27 dim 0 : vector<8x128xf32>, i32 -> vector<8x128xf32>
    %49 = tpu.iota {dimensions = array<i32: 0>} : vector<8x128xi32>
    %c7_i32_28 = arith.constant 7 : i32
    %50 = vector.broadcast %c7_i32_28 : i32 to vector<8x128xi32>
    %51 = arith.cmpi slt, %49, %50 : vector<8x128xi32>
    %cst_29 = arith.constant 0.000000e+00 : f32
    %52 = vector.broadcast %cst_29 : f32 to vector<8x128xf32>
    %53 = arith.select %51, %48, %52 : vector<8x128xi1>, vector<8x128xf32>
    %54 = tpu.concatenate %47, %41, %53 in 1 : vector<8x128xf32>, vector<8x128xf32>, vector<8x128xf32> -> vector<8x384xf32>
    %c0_30 = arith.constant 0 : index
    %c0_31 = arith.constant 0 : index
    %55 = vector.load %arg8[%c0_30, %c0_31] : memref<384x128xf32, #tpu.memory_space<vmem>>, vector<384x128xf32>
    %cst_32 = arith.constant dense<0.000000e+00> : vector<8x128xf32>
    %56 = tpu.matmul %54, %55, %cst_32 {dimension_numbers = #tpu.dot_dimension_numbers<[1], [0], [0], [1], [0, 0, 1, 1], [], []>} : vector<8x384xf32>, vector<384x128xf32>, vector<8x128xf32> -> vector<8x128xf32>
    %c0_33 = arith.constant 0 : index
    %c0_34 = arith.constant 0 : index
    %57 = vector.load %arg9[%c0_33, %c0_34] : memref<1x128xf32, #tpu.memory_space<vmem>>, vector<1x128xf32>
    %58 = vector.broadcast %57 : vector<1x128xf32> to vector<8x128xf32>
    %59 = arith.addf %56, %58 : vector<8x128xf32>
    %60 = arith.addf %59, %7 : vector<8x128xf32>
    %c0_35 = arith.constant 0 : index
    %c0_36 = arith.constant 0 : index
    %c0_37 = arith.constant 0 : index
    %61 = vector.load %arg10[%c0_35, %c0_36, %c0_37] : memref<1x8x128xf32, #tpu.memory_space<vmem>>, vector<1x8x128xf32>
    %62 = vector.shape_cast %61 : vector<1x8x128xf32> to vector<8x128xf32>
    %63 = vector.shape_cast %60 : vector<8x128xf32> to vector<1x8x128xf32>
    tpu.vector_store %arg10[%c0_35, %c0_36, %c0_37], %63 {strides = array<i32>} : memref<1x8x128xf32, #tpu.memory_space<vmem>>, vector<1x8x128xf32>,
    return
  }
  func.func @transform_0(%arg0: i32) -> (i32, i32, i32) {
    %c0_i32 = arith.constant 0 : i32
    %c0_i32_0 = arith.constant 0 : i32
    %c0_i32_1 = arith.constant 0 : i32
    return %arg0, %c0_i32, %c0_i32_0 : i32, i32, i32
  }
  func.func @transform_1(%arg0: i32) -> (i32, i32) {
    %c0_i32 = arith.constant 0 : i32
    %c0_i32_0 = arith.constant 0 : i32
    %c0_i32_1 = arith.constant 0 : i32
    return %c0_i32, %c0_i32_0 : i32, i32
  }
  func.func @transform_2(%arg0: i32) -> (i32, i32) {
    %c0_i32 = arith.constant 0 : i32
    %c0_i32_0 = arith.constant 0 : i32
    %c0_i32_1 = arith.constant 0 : i32
    return %c0_i32, %c0_i32_0 : i32, i32
  }
  func.func @transform_3(%arg0: i32) -> (i32, i32) {
    %c0_i32 = arith.constant 0 : i32
    %c0_i32_0 = arith.constant 0 : i32
    %c0_i32_1 = arith.constant 0 : i32
    return %c0_i32, %c0_i32_0 : i32, i32
  }
  func.func @transform_4(%arg0: i32) -> (i32, i32) {
    %c0_i32 = arith.constant 0 : i32
    %c0_i32_0 = arith.constant 0 : i32
    %c0_i32_1 = arith.constant 0 : i32
    return %c0_i32, %c0_i32_0 : i32, i32
  }
  func.func @transform_5(%arg0: i32) -> (i32, i32) {
    %c0_i32 = arith.constant 0 : i32
    %c0_i32_0 = arith.constant 0 : i32
    %c0_i32_1 = arith.constant 0 : i32
    return %c0_i32, %c0_i32_0 : i32, i32
  }
  func.func @transform_6(%arg0: i32) -> (i32, i32) {
    %c0_i32 = arith.constant 0 : i32
    %c0_i32_0 = arith.constant 0 : i32
    %c0_i32_1 = arith.constant 0 : i32
    return %c0_i32, %c0_i32_0 : i32, i32
  }
  func.func @transform_7(%arg0: i32) -> (i32, i32) {
    %c0_i32 = arith.constant 0 : i32
    %c0_i32_0 = arith.constant 0 : i32
    %c0_i32_1 = arith.constant 0 : i32
    return %c0_i32, %c0_i32_0 : i32, i32
  }
  func.func @transform_8(%arg0: i32) -> (i32, i32) {
    %c0_i32 = arith.constant 0 : i32
    %c0_i32_0 = arith.constant 0 : i32
    %c0_i32_1 = arith.constant 0 : i32
    return %c0_i32, %c0_i32_0 : i32, i32
  }
  func.func @transform_9(%arg0: i32) -> (i32, i32, i32) {
    %c0_i32 = arith.constant 0 : i32
    %c0_i32_0 = arith.constant 0 : i32
    %c0_i32_1 = arith.constant 0 : i32
    return %arg0, %c0_i32, %c0_i32_0 : i32, i32, i32
  }
}

</mosaic_0001>

<llo_original>
// kernel: tpu_custom_call.1
$region0: #{tpu_custom_call.1}
  #allocation0 [shape = 'u32[]', space=smem, size = 0x4, offset = 0x4, fixed_abs, tag = 'smem constant byte address 0x4 - core index']
  #allocation1 [shape = 'u32[144,128]{1,0:T(1,128)}', space=vmem, size = 0x12000, scoped, tag = 'internal scratch']
  %s0 = inlined_call_operand.vmem [shape: f32[2,17,128], index: 0, kind: input, shape index: {}]
  %s1 = inlined_call_operand.vmem [shape: f32[1,128], index: 1, kind: input, shape index: {}]
  %s2 = inlined_call_operand.vmem [shape: f32[1,128], index: 2, kind: input, shape index: {}]
  %s3 = inlined_call_operand.hbm [shape: f32[384,128], index: 3, kind: input, shape index: {}]
  %s4 = inlined_call_operand.vmem [shape: f32[1,128], index: 4, kind: input, shape index: {}]
  %s5 = inlined_call_operand.vmem [shape: f32[1,128], index: 5, kind: input, shape index: {}]
  %s6 = inlined_call_operand.vmem [shape: f32[1,128], index: 6, kind: input, shape index: {}]
  %s7 = inlined_call_operand.hbm [shape: f32[384,128], index: 7, kind: input, shape index: {}]
  %s8 = inlined_call_operand.vmem [shape: f32[1,128], index: 8, kind: input, shape index: {}]
  %s9 = inlined_call_operand.hbm [shape: f32[2,8,128], index: 9, kind: output, shape index: {}]
  %s10 = sld [smem:[#allocation0]]
  $region77: #{tpu_custom_call.1} parent=0
    _
  %s12 = ssub.s32 1, %s10
  %s13 = scalar_select 0, %s12, %s10
  $region1: #{tpu_custom_call.1} parent=0
    #allocation2 [shape = 'u8[196608]{0}', space=vmem, size = 0x30000, scoped, tag = 'input window, operand 3, single buffered']
    #allocation3 [shape = 's32[2]{0}', space=sflag, size = 0x8, scoped, tag = 'scoped memory for tpu_custom_call.1']
    #allocation4 [shape = 's32[2]{0}', space=sflag, size = 0x8, scoped, tag = 'scoped memory for tpu_custom_call.1']
    #allocation5 [shape = 'u8[196608]{0}', space=vmem, size = 0x30000, scoped, tag = 'input window, operand 7, single buffered']
    #allocation6 [shape = 's32[1]{0}', space=sflag, size = 0x4, scoped, tag = 'scoped memory for tpu_custom_call.1']
    #allocation7 [shape = 'u8[8192]{0}', space=vmem, size = 0x2000, scoped, tag = 'output window, operand 0']
    %14 = vsyncpa [#allocation3], 0
    %15 = vsyncpa [#allocation6], 0
    %16 = vsyncpa [#allocation4], 0
    %s17 = scalar_lea.sflag [#allocation4], 1
    %18 = vsyncpa %s17, 0
    loop: start=0, step=1, limit=4
    $region2: #{tpu_custom_call.1} parent=1 // loop_pre_header
      _
    $region3: #{tpu_custom_call.1} parent=1 // loop_header
      %s20 = sphi 0, %s24
      %p21 = scmp.ge.s32.totalorder %s20, 4
      %s30 = sphi 0, %s32
      %s33 = sphi 0, %s30
      %s34 = sphi 0, %s33
      %s50 = sphi 0, %s34
      %s54 = sphi 0, %s54
      %s56 = sphi 0, %s54
      %s57 = sphi 0, %s56
      %s71 = sphi 0, %s57
      %s75 = sphi 0, %s75
      %s77 = sphi 0, %s75
      %s78 = sphi 0, %s77
      %s92 = sphi 0, %s78
      %s96 = sphi 0, %s96
      %s98 = sphi 0, %s96
      %s99 = sphi 0, %s98
      %s113 = sphi 0, %s99
      %s117 = sphi 0, %s117
      %s119 = sphi 0, %s117
      %s120 = sphi 0, %s119
      %s134 = sphi 0, %s120
      %s138 = sphi 0, %s138
      %s140 = sphi 0, %s138
      %s141 = sphi 0, %s140
      %s155 = sphi 0, %s141
      %s159 = sphi 0, %s159
      %s161 = sphi 0, %s159
      %s162 = sphi 0, %s161
      %s176 = sphi 0, %s162
      %s180 = sphi 0, %s180
      %s182 = sphi 0, %s180
      %s183 = sphi 0, %s182
      %s197 = sphi 0, %s183
      %s201 = sphi 0, %s201
      %s203 = sphi 0, %s201
      %s204 = sphi 0, %s203
      %s218 = sphi 0, %s204
      %s224 = sphi 0, %s226
      %s227 = sphi 0, %s224
      %s228 = sphi 0, %s227
      %s244 = sphi 0, %s228
    $region4: #{tpu_custom_call.1} parent=1 // loop_header_branch
      %23 = sbr.rel (%p21) target = $region8
    $region5: #{tpu_custom_call.1} parent=1 // loop_body
      %s25 = ssub.s32 %s20, 1
      %s26 = ssub.s32 %s20, 2
      %s27 = sadd.s32 %s20, 1
      %s28 = ssub.s32 %s20, %s27
      %p29 = scmp.eq.s32.totalorder %s28, 0
      %s31 = sadd.s32 %s30, 1
      %s32 = scalar_select %p29, %s30, %s31
      %p35 = pneg %p29
      %p36 = scmp.eq.s32.totalorder %s20, 1
      %p37 = por %p35, %p36
      %p38 = scmp.ne.s32.totalorder %s30, %s33
      %p39 = scmp.eq.s32.totalorder %s20, 0
      %p40 = por %p38, %p39
      %p41 = scmp.ne.s32.totalorder %s30, %s33
      %p42 = scmp.eq.s32.totalorder %s25, 1
      %p43 = por %p41, %p42
      %p44 = scmp.ne.s32.totalorder %s33, %s34
      %p45 = scmp.eq.s32.totalorder %s25, 0
      %p46 = por %p44, %p45
      %p47 = scmp.ne.s32.totalorder %s33, %s34
      %p48 = scmp.eq.s32.totalorder %s26, 1
      %p49 = por %p47, %p48
      %p51 = scmp.ne.s32.totalorder %s34, %s50
      %p52 = scmp.eq.s32.totalorder %s26, 0
      %p53 = por %p51, %p52
      %s55 = sadd.s32 %s54, 1
      %p58 = scmp.eq.s32.totalorder %s20, 1
      %p59 = scmp.ne.s32.totalorder %s54, %s56
      %p60 = scmp.eq.s32.totalorder %s20, 0
      %p61 = por %p59, %p60
      %p62 = scmp.ne.s32.totalorder %s54, %s56
      %p63 = scmp.eq.s32.totalorder %s25, 1
      %p64 = por %p62, %p63
      %p65 = scmp.ne.s32.totalorder %s56, %s57
      %p66 = scmp.eq.s32.totalorder %s25, 0
      %p67 = por %p65, %p66
      %p68 = scmp.ne.s32.totalorder %s56, %s57
      %p69 = scmp.eq.s32.totalorder %s26, 1
      %p70 = por %p68, %p69
      %p72 = scmp.ne.s32.totalorder %s57, %s71
      %p73 = scmp.eq.s32.totalorder %s26, 0
      %p74 = por %p72, %p73
      %s76 = sadd.s32 %s75, 1
      %p79 = scmp.eq.s32.totalorder %s20, 1
      %p80 = scmp.ne.s32.totalorder %s75, %s77
      %p81 = scmp.eq.s32.totalorder %s20, 0
      %p82 = por %p80, %p81
      %p83 = scmp.ne.s32.totalorder %s75, %s77
      %p84 = scmp.eq.s32.totalorder %s25, 1
      %p85 = por %p83, %p84
      %p86 = scmp.ne.s32.totalorder %s77, %s78
      %p87 = scmp.eq.s32.totalorder %s25, 0
      %p88 = por %p86, %p87
      %p89 = scmp.ne.s32.totalorder %s77, %s78
      %p90 = scmp.eq.s32.totalorder %s26, 1
      %p91 = por %p89, %p90
      %p93 = scmp.ne.s32.totalorder %s78, %s92
      %p94 = scmp.eq.s32.totalorder %s26, 0
      %p95 = por %p93, %p94
      %s97 = sadd.s32 %s96, 1
      %p100 = scmp.eq.s32.totalorder %s20, 1
      %p101 = scmp.ne.s32.totalorder %s96, %s98
      %p102 = scmp.eq.s32.totalorder %s20, 0
      %p103 = por %p101, %p102
      %p104 = scmp.ne.s32.totalorder %s96, %s98
      %p105 = scmp.eq.s32.totalorder %s25, 1
      %p106 = por %p104, %p105
      %p107 = scmp.ne.s32.totalorder %s98, %s99
      %p108 = scmp.eq.s32.totalorder %s25, 0
      %p109 = por %p107, %p108
      %p110 = scmp.ne.s32.totalorder %s98, %s99
      %p111 = scmp.eq.s32.totalorder %s26, 1
      %p112 = por %p110, %p111
      %p114 = scmp.ne.s32.totalorder %s99, %s113
      %p115 = scmp.eq.s32.totalorder %s26, 0
      %p116 = por %p114, %p115
      %s118 = sadd.s32 %s117, 1
      %p121 = scmp.eq.s32.totalorder %s20, 1
      %p122 = scmp.ne.s32.totalorder %s117, %s119
      %p123 = scmp.eq.s32.totalorder %s20, 0
      %p124 = por %p122, %p123
      %p125 = scmp.ne.s32.totalorder %s117, %s119
      %p126 = scmp.eq.s32.totalorder %s25, 1
      %p127 = por %p125, %p126
      %p128 = scmp.ne.s32.totalorder %s119, %s120
      %p129 = scmp.eq.s32.totalorder %s25, 0
      %p130 = por %p128, %p129
      %p131 = scmp.ne.s32.totalorder %s119, %s120
      %p132 = scmp.eq.s32.totalorder %s26, 1
      %p133 = por %p131, %p132
      %p135 = scmp.ne.s32.totalorder %s120, %s134
      %p136 = scmp.eq.s32.totalorder %s26, 0
      %p137 = por %p135, %p136
      %s139 = sadd.s32 %s138, 1
      %p142 = scmp.eq.s32.totalorder %s20, 1
      %p143 = scmp.ne.s32.totalorder %s138, %s140
      %p144 = scmp.eq.s32.totalorder %s20, 0
      %p145 = por %p143, %p144
      %p146 = scmp.ne.s32.totalorder %s138, %s140
      %p147 = scmp.eq.s32.totalorder %s25, 1
      %p148 = por %p146, %p147
      %p149 = scmp.ne.s32.totalorder %s140, %s141
      %p150 = scmp.eq.s32.totalorder %s25, 0
      %p151 = por %p149, %p150
      %p152 = scmp.ne.s32.totalorder %s140, %s141
      %p153 = scmp.eq.s32.totalorder %s26, 1
      %p154 = por %p152, %p153
      %p156 = scmp.ne.s32.totalorder %s141, %s155
      %p157 = scmp.eq.s32.totalorder %s26, 0
      %p158 = por %p156, %p157
      %s160 = sadd.s32 %s159, 1
      %p163 = scmp.eq.s32.totalorder %s20, 1
      %p164 = scmp.ne.s32.totalorder %s159, %s161
      %p165 = scmp.eq.s32.totalorder %s20, 0
      %p166 = por %p164, %p165
      %p167 = scmp.ne.s32.totalorder %s159, %s161
      %p168 = scmp.eq.s32.totalorder %s25, 1
      %p169 = por %p167, %p168
      %p170 = scmp.ne.s32.totalorder %s161, %s162
      %p171 = scmp.eq.s32.totalorder %s25, 0
      %p172 = por %p170, %p171
      %p173 = scmp.ne.s32.totalorder %s161, %s162
      %p174 = scmp.eq.s32.totalorder %s26, 1
      %p175 = por %p173, %p174
      %p177 = scmp.ne.s32.totalorder %s162, %s176
      %p178 = scmp.eq.s32.totalorder %s26, 0
      %p179 = por %p177, %p178
      %s181 = sadd.s32 %s180, 1
      %p184 = scmp.eq.s32.totalorder %s20, 1
      %p185 = scmp.ne.s32.totalorder %s180, %s182
      %p186 = scmp.eq.s32.totalorder %s20, 0
      %p187 = por %p185, %p186
      %p188 = scmp.ne.s32.totalorder %s180, %s182
      %p189 = scmp.eq.s32.totalorder %s25, 1
      %p190 = por %p188, %p189
      %p191 = scmp.ne.s32.totalorder %s182, %s183
      %p192 = scmp.eq.s32.totalorder %s25, 0
      %p193 = por %p191, %p192
      %p194 = scmp.ne.s32.totalorder %s182, %s183
      %p195 = scmp.eq.s32.totalorder %s26, 1
      %p196 = por %p194, %p195
      %p198 = scmp.ne.s32.totalorder %s183, %s197
      %p199 = scmp.eq.s32.totalorder %s26, 0
      %p200 = por %p198, %p199
      %s202 = sadd.s32 %s201, 1
      %p205 = scmp.eq.s32.totalorder %s20, 1
      %p206 = scmp.ne.s32.totalorder %s201, %s203
      %p207 = scmp.eq.s32.totalorder %s20, 0
      %p208 = por %p206, %p207
      %p209 = scmp.ne.s32.totalorder %s201, %s203
      %p210 = scmp.eq.s32.totalorder %s25, 1
      %p211 = por %p209, %p210
      %p212 = scmp.ne.s32.totalorder %s203, %s204
      %p213 = scmp.eq.s32.totalorder %s25, 0
      %p214 = por %p212, %p213
      %p215 = scmp.ne.s32.totalorder %s203, %s204
      %p216 = scmp.eq.s32.totalorder %s26, 1
      %p217 = por %p215, %p216
      %p219 = scmp.ne.s32.totalorder %s204, %s218
      %p220 = scmp.eq.s32.totalorder %s26, 0
      %p221 = por %p219, %p220
      %s222 = ssub.s32 %s20, %s27
      %p223 = scmp.eq.s32.totalorder %s222, 0
      %s225 = sadd.s32 %s224, 1
      %s226 = scalar_select %p223, %s224, %s225
      %p229 = pneg %p223
      %p230 = scmp.eq.s32.totalorder %s20, 1
      %p231 = por %p229, %p230
      %p232 = scmp.ne.s32.totalorder %s224, %s227
      %p233 = scmp.eq.s32.totalorder %s20, 0
      %p234 = por %p232, %p233
      %p235 = scmp.ne.s32.totalorder %s224, %s227
      %p236 = scmp.eq.s32.totalorder %s25, 1
      %p237 = por %p235, %p236
      %p238 = scmp.ne.s32.totalorder %s227, %s228
      %p239 = scmp.eq.s32.totalorder %s25, 0
      %p240 = por %p238, %p239
      %p241 = scmp.ne.s32.totalorder %s227, %s228
      %p242 = scmp.eq.s32.totalorder %s26, 1
      %p243 = por %p241, %p242
      %p245 = scmp.ne.s32.totalorder %s228, %s244
      %p246 = scmp.eq.s32.totalorder %s26, 0
      %p247 = por %p245, %p246
      %p248 = scmp.le.s32.totalorder 1, %s20
      %p249 = scmp.lt.s32.totalorder %s20, 3
      %p250 = pnand %p248, %p249
      %p251 = pneg %p250
      // Predicated region
      $region9: #{tpu_custom_call.1} parent=5 // pred_check
        _
      $region10: #{tpu_custom_call.1} parent=5 // pred_check_branch
        %253 = sbr.rel (%p250) target = $region12
      $region11: #{tpu_custom_call.1} parent=5 // pred_region
        %s254 = ssub.s32 %s20, 1
        // Predicated region
        $region13: #{tpu_custom_call.1} parent=11 // pred_check
          %p255 = pneg %p67
        $region14: #{tpu_custom_call.1} parent=11 // pred_check_branch
          %257 = sbr.rel (%p255) target = $region16
        $region15: #{tpu_custom_call.1} parent=11 // pred_region
          _
        $region16: #{tpu_custom_call.1} parent=11 // pred_fallthru
          _
        // Predicated region
        $region17: #{tpu_custom_call.1} parent=11 // pred_check
          %p258 = pneg %p88
        $region18: #{tpu_custom_call.1} parent=11 // pred_check_branch
          %260 = sbr.rel (%p258) target = $region20
        $region19: #{tpu_custom_call.1} parent=11 // pred_region
          _
        $region20: #{tpu_custom_call.1} parent=11 // pred_fallthru
          _
        // Predicated region
        $region21: #{tpu_custom_call.1} parent=11 // pred_check
          %p261 = pneg %p109
        $region22: #{tpu_custom_call.1} parent=11 // pred_check_branch
          %263 = sbr.rel (%p261) target = $region24
        $region23: #{tpu_custom_call.1} parent=11 // pred_region
          %s265 = ssub.s32 6144, 6144
          %266 = vsyncadd [#allocation3], %s265
          %s267 = sshll.u32 [#allocation2], 4
          %s268 = int_to_ptr.vmem [resolvable:$true] %s267
          %273 = dma.hbm_to_vmem [thread:$0]  %s3, 6144, %s268, [#allocation3], 128, 128, 8
        $region24: #{tpu_custom_call.1} parent=11 // pred_fallthru
          _
        // Predicated region
        $region25: #{tpu_custom_call.1} parent=11 // pred_check
          %p274 = pneg %p130
        $region26: #{tpu_custom_call.1} parent=11 // pred_check_branch
          %276 = sbr.rel (%p274) target = $region28
        $region27: #{tpu_custom_call.1} parent=11 // pred_region
          _
        $region28: #{tpu_custom_call.1} parent=11 // pred_fallthru
          _
        // Predicated region
        $region29: #{tpu_custom_call.1} parent=11 // pred_check
          %p277 = pneg %p151
        $region30: #{tpu_custom_call.1} parent=11 // pred_check_branch
          %279 = sbr.rel (%p277) target = $region32
        $region31: #{tpu_custom_call.1} parent=11 // pred_region
          _
        $region32: #{tpu_custom_call.1} parent=11 // pred_fallthru
          _
        // Predicated region
        $region33: #{tpu_custom_call.1} parent=11 // pred_check
          %p280 = pneg %p172
        $region34: #{tpu_custom_call.1} parent=11 // pred_check_branch
          %282 = sbr.rel (%p280) target = $region36
        $region35: #{tpu_custom_call.1} parent=11 // pred_region
          _
        $region36: #{tpu_custom_call.1} parent=11 // pred_fallthru
          _
        // Predicated region
        $region37: #{tpu_custom_call.1} parent=11 // pred_check
          %p283 = pneg %p193
        $region38: #{tpu_custom_call.1} parent=11 // pred_check_branch
          %285 = sbr.rel (%p283) target = $region40
        $region39: #{tpu_custom_call.1} parent=11 // pred_region
          %s287 = ssub.s32 6144, 6144
          %288 = vsyncadd [#allocation6], %s287
          %s289 = sshll.u32 [#allocation5], 4
          %s290 = int_to_ptr.vmem [resolvable:$true] %s289
          %295 = dma.hbm_to_vmem [thread:$0]  %s7, 6144, %s290, [#allocation6], 128, 128, 8
        $region40: #{tpu_custom_call.1} parent=11 // pred_fallthru
          _
        // Predicated region
        $region41: #{tpu_custom_call.1} parent=11 // pred_check
          %p296 = pneg %p214
        $region42: #{tpu_custom_call.1} parent=11 // pred_check_branch
          %298 = sbr.rel (%p296) target = $region44
        $region43: #{tpu_custom_call.1} parent=11 // pred_region
          _
        $region44: #{tpu_custom_call.1} parent=11 // pred_fallthru
          _
      $region12: #{tpu_custom_call.1} parent=5 // pred_fallthru
        _
      %p299 = scmp.lt.s32.totalorder %s20, 2
      // Predicated region
      $region45: #{tpu_custom_call.1} parent=5 // pred_check
        %p300 = pneg %p299
      $region46: #{tpu_custom_call.1} parent=5 // pred_check_branch
        %302 = sbr.rel (%p300) target = $region48
      $region47: #{tpu_custom_call.1} parent=5 // pred_region
        // Predicated region
        $region49: #{tpu_custom_call.1} parent=47 // pred_check
          %p303 = pneg %p40
        $region50: #{tpu_custom_call.1} parent=47 // pred_check_branch
          %305 = sbr.rel (%p303) target = $region52
        $region51: #{tpu_custom_call.1} parent=47 // pred_region
          %p306 = scmp.lt.s32.totalorder %s20, 1
          %s307 = scalar_select %p306, %s20, 1
          %s308 = smul.addr %s307, 3
          %s309 = smul.addr %s308, 8
          %s310 = scalar_lea.vmem %s0, %s309
        $region52: #{tpu_custom_call.1} parent=47 // pred_fallthru
          _
      $region48: #{tpu_custom_call.1} parent=5 // pred_fallthru
        _
      %p311 = scmp.le.s32.totalorder 1, %s20
      %p312 = scmp.lt.s32.totalorder %s20, 3
      %p313 = pnand %p311, %p312
      %p314 = pneg %p313
      // Predicated region
      $region53: #{tpu_custom_call.1} parent=5 // pred_check
        _
      $region54: #{tpu_custom_call.1} parent=5 // pred_check_branch
        %316 = sbr.rel (%p313) target = $region56
      $region55: #{tpu_custom_call.1} parent=5 // pred_region
        %s317 = ssub.s32 %s20, 1
        // Predicated region
        $region57: #{tpu_custom_call.1} parent=55 // pred_check
          %p318 = pneg %p109
        $region58: #{tpu_custom_call.1} parent=55 // pred_check_branch
          %320 = sbr.rel (%p318) target = $region60
        $region59: #{tpu_custom_call.1} parent=55 // pred_region
          %321 = dma.done [#allocation3], 6144
        $region60: #{tpu_custom_call.1} parent=55 // pred_fallthru
          _
        // Predicated region
        $region61: #{tpu_custom_call.1} parent=55 // pred_check
          %p322 = pneg %p193
        $region62: #{tpu_custom_call.1} parent=55 // pred_check_branch
          %324 = sbr.rel (%p322) target = $region64
        $region63: #{tpu_custom_call.1} parent=55 // pred_region
          %325 = dma.done [#allocation6], 6144
        $region64: #{tpu_custom_call.1} parent=55 // pred_fallthru
          _
        %p326 = scmp.lt.s32.totalorder %s25, 1
        %s327 = scalar_select %p326, %s25, 1
        %s328 = smul.addr %s327, 3
        %s329 = smul.addr %s328, 8
        %s330 = scalar_lea.vmem %s0, %s329
        %p331 = pneg %p46
        %p332 = pneg %p43
        %p333 = pneg %p67
        %p334 = pneg %p64
        %p335 = pneg %p88
        %p336 = pneg %p85
        %p337 = pneg %p109
        %p338 = pneg %p106
        %p339 = pneg %p130
        %p340 = pneg %p127
        %p341 = pneg %p151
        %p342 = pneg %p148
        %p343 = pneg %p172
        %p344 = pneg %p169
        %p345 = pneg %p193
        %p346 = pneg %p190
        %p347 = pneg %p214
        %p348 = pneg %p211
        %p349 = pneg %p240
        %p350 = pneg %p237
        %s351 = sand.u32 %s227, 1
        %s352 = scalar_lea.sflag [#allocation4], %s351
        %s353 = sand.u32 %s227, 1
        %s354 = smul.addr %s353, 8
        %s355 = scalar_lea.vmem [#allocation7], %s354
        %p356 = scmp.lt.s32.totalorder %s25, 1
        %s357 = scalar_select %p356, %s25, 1
        %s358 = smul.addr %s357, 3
        %s359 = smul.addr %s358, 8
        %s360 = scalar_lea.vmem %s0, %s359
        %v361 = vld [vmem:[%s360] ss:$2 sm:$0xff]
        %s362 = scalar_lea.vmem %s360, 1
        %v363 = vld [vmem:[%s362] ss:$2 sm:$0xff]
        %s364 = scalar_lea.vmem %s360, 2
        %v365 = vld [vmem:[%s364] ss:$2 sm:$0xff]
        %v366 = vmax.f32 %v363, %v365
        %v367 = vmax.f32 %v361, %v366
        %v368 = vld [vmem:[%s1] sm:$0x1]
        %v370 = vlaneseq
        %v371 = vshrl.u32 %v370, 7
        %v372 = vsub.s32 0, %v371
        %v373 = vrot.slane %v368, %v372
        %v375 = vmul.f32 %v367, %v373
        %v376 = vld [vmem:[%s2] sm:$0x1]
        %v378 = vlaneseq
        %v379 = vshrl.u32 %v378, 7
        %v380 = vsub.s32 0, %v379
        %v381 = vrot.slane %v376, %v380
        %v383 = vadd.f32 %v375, %v381
        %v384 = vmax.f32 %v383, 0.0
        %v385 = vrot.slane %v384, 7
        %v386 = vlaneseq
        %v387 = vshrl.u32 %v386, 7
        %vm388 = vcmp.ge.s32.totalorder %v387, 1
        %v389 = vsel %vm388, %v385, 0.0
        %v390 = vrot.slane %v384, 1
        %vm391 = vcmp.lt.s32.totalorder %v387, 7
        %v392 = vsel %vm391, %v390, 0.0
        %v393 = vld [vmem:[#allocation2] sm:$0xff]
        %v394 = vld [vmem:[#allocation2 + $0x8] sm:$0xff]
        %v395 = vld [vmem:[#allocation2 + $0x10] sm:$0xff]
        %v396 = vld [vmem:[#allocation2 + $0x18] sm:$0xff]
        %v397 = vld [vmem:[#allocation2 + $0x20] sm:$0xff]
        %v398 = vld [vmem:[#allocation2 + $0x28] sm:$0xff]
        %v399 = vld [vmem:[#allocation2 + $0x30] sm:$0xff]
        %v400 = vld [vmem:[#allocation2 + $0x38] sm:$0xff]
        %v401 = vld [vmem:[#allocation2 + $0x40] sm:$0xff]
        %v402 = vld [vmem:[#allocation2 + $0x48] sm:$0xff]
        %v403 = vld [vmem:[#allocation2 + $0x50] sm:$0xff]
        %v404 = vld [vmem:[#allocation2 + $0x58] sm:$0xff]
        %v405 = vld [vmem:[#allocation2 + $0x60] sm:$0xff]
        %v406 = vld [vmem:[#allocation2 + $0x68] sm:$0xff]
        %v407 = vld [vmem:[#allocation2 + $0x70] sm:$0xff]
        %v408 = vld [vmem:[#allocation2 + $0x78] sm:$0xff]
        %v409 = vld [vmem:[#allocation2 + $0x80] sm:$0xff]
        %v410 = vld [vmem:[#allocation2 + $0x88] sm:$0xff]
        %v411 = vld [vmem:[#allocation2 + $0x90] sm:$0xff]
        %v412 = vld [vmem:[#allocation2 + $0x98] sm:$0xff]
        %v413 = vld [vmem:[#allocation2 + $0xa0] sm:$0xff]
        %v414 = vld [vmem:[#allocation2 + $0xa8] sm:$0xff]
        %v415 = vld [vmem:[#allocation2 + $0xb0] sm:$0xff]
        %v416 = vld [vmem:[#allocation2 + $0xb8] sm:$0xff]
        %v417 = vld [vmem:[#allocation2 + $0xc0] sm:$0xff]
        %v418 = vld [vmem:[#allocation2 + $0xc8] sm:$0xff]
        %v419 = vld [vmem:[#allocation2 + $0xd0] sm:$0xff]
        %v420 = vld [vmem:[#allocation2 + $0xd8] sm:$0xff]
        %v421 = vld [vmem:[#allocation2 + $0xe0] sm:$0xff]
        %v422 = vld [vmem:[#allocation2 + $0xe8] sm:$0xff]
        %v423 = vld [vmem:[#allocation2 + $0xf0] sm:$0xff]
        %v424 = vld [vmem:[#allocation2 + $0xf8] sm:$0xff]
        %v425 = vld [vmem:[#allocation2 + $0x100] sm:$0xff]
        %v426 = vld [vmem:[#allocation2 + $0x108] sm:$0xff]
        %v427 = vld [vmem:[#allocation2 + $0x110] sm:$0xff]
        %v428 = vld [vmem:[#allocation2 + $0x118] sm:$0xff]
        %v429 = vld [vmem:[#allocation2 + $0x120] sm:$0xff]
        %v430 = vld [vmem:[#allocation2 + $0x128] sm:$0xff]
        %v431 = vld [vmem:[#allocation2 + $0x130] sm:$0xff]
        %v432 = vld [vmem:[#allocation2 + $0x138] sm:$0xff]
        %v433 = vld [vmem:[#allocation2 + $0x140] sm:$0xff]
        %v434 = vld [vmem:[#allocation2 + $0x148] sm:$0xff]
        %v435 = vld [vmem:[#allocation2 + $0x150] sm:$0xff]
        %v436 = vld [vmem:[#allocation2 + $0x158] sm:$0xff]
        %v437 = vld [vmem:[#allocation2 + $0x160] sm:$0xff]
        %v438 = vld [vmem:[#allocation2 + $0x168] sm:$0xff]
        %v439 = vld [vmem:[#allocation2 + $0x170] sm:$0xff]
        %v440 = vld [vmem:[#allocation2 + $0x178] sm:$0xff]
        %v441 = vld [vmem:[%s4] sm:$0x1]
        %v443 = vlaneseq
        %v444 = vshrl.u32 %v443, 7
        %v445 = vsub.s32 0, %v444
        %v446 = vrot.slane %v441, %v445
        %448 = vmatprep.subr.mxu0 0.0
        %449 = vmatpush1.msra.mxu0 %v393
        %450 = vmatprep.subr.mxu0 0.0
        %451 = vmatpush1.msra.mxu0 %v394
        %452 = vmatprep.subr.mxu0 0.0
        %453 = vmatpush1.msra.mxu0 %v395
        %454 = vmatprep.subr.mxu0 0.0
        %455 = vmatpush1.msra.mxu0 %v396
        %456 = vmatprep.subr.mxu0 0.0
        %457 = vmatpush1.msra.mxu0 %v397
        %458 = vmatprep.subr.mxu0 0.0
        %459 = vmatpush1.msra.mxu0 %v398
        %460 = vmatprep.subr.mxu0 0.0
        %461 = vmatpush1.msra.mxu0 %v399
        %462 = vmatprep.subr.mxu0 0.0
        %463 = vmatpush1.msra.mxu0 %v400
        %464 = vmatprep.subr.mxu0 0.0
        %465 = vmatpush1.msra.mxu0 %v401
        %466 = vmatprep.subr.mxu0 0.0
        %467 = vmatpush1.msra.mxu0 %v402
        %468 = vmatprep.subr.mxu0 0.0
        %469 = vmatpush1.msra.mxu0 %v403
        %470 = vmatprep.subr.mxu0 0.0
        %471 = vmatpush1.msra.mxu0 %v404
        %472 = vmatprep.subr.mxu0 0.0
        %473 = vmatpush1.msra.mxu0 %v405
        %474 = vmatprep.subr.mxu0 0.0
        %475 = vmatpush1.msra.mxu0 %v406
        %476 = vmatprep.subr.mxu0 0.0
        %477 = vmatpush1.msra.mxu0 %v407
        %478 = vmatprep.subr.mxu0 0.0
        %479 = vmatpush1.msra.mxu0 %v408
        %480 = vmatprep.subr.mxu0 0.0
        %481 = vmatpush1.msra.mxu0 %v409
        %482 = vmatprep.subr.mxu0 0.0
        %483 = vmatpush1.msra.mxu0 %v410
        %484 = vmatprep.subr.mxu0 0.0
        %485 = vmatpush1.msra.mxu0 %v411
        %486 = vmatprep.subr.mxu0 0.0
        %487 = vmatpush1.msra.mxu0 %v412
        %488 = vmatprep.subr.mxu0 0.0
        %489 = vmatpush1.msra.mxu0 %v413
        %490 = vmatprep.subr.mxu0 0.0
        %491 = vmatpush1.msra.mxu0 %v414
        %492 = vmatprep.subr.mxu0 0.0
        %493 = vmatpush1.msra.mxu0 %v415
        %494 = vmatprep.subr.mxu0 0.0
        %495 = vmatpush1.msra.mxu0 %v416
        %496 = vmatprep.subr.mxu0 0.0
        %497 = vmatpush1.msra.mxu0 %v417
        %498 = vmatprep.subr.mxu0 0.0
        %499 = vmatpush1.msra.mxu0 %v418
        %500 = vmatprep.subr.mxu0 0.0
        %501 = vmatpush1.msra.mxu0 %v419
        %502 = vmatprep.subr.mxu0 0.0
        %503 = vmatpush1.msra.mxu0 %v420
        %504 = vmatprep.subr.mxu0 0.0
        %505 = vmatpush1.msra.mxu0 %v421
        %506 = vmatprep.subr.mxu0 0.0
        %507 = vmatpush1.msra.mxu0 %v422
        %508 = vmatprep.subr.mxu0 0.0
        %509 = vmatpush1.msra.mxu0 %v423
        %510 = vmatprep.subr.mxu0 0.0
        %511 = vmatpush1.msra.mxu0 %v424
        %512 = vmatprep.mubr.f32.mxu0 %v384
        %513 = vmatmul.mubr.f32.gmra.mrb[0].mxu0 %v389
        %v514 = vpop.f32.mrb[0].mxu0
        %v515 = vadd.f32 %v446, %v514
        %v516 = vpop.f32.mrb[0].mxu0
        %517 = vdwg.mxu0
        %518 = vmatprep.subr.mxu0 0.0
        %519 = vmatpush1.msra.mxu0 %v425
        %520 = vmatprep.subr.mxu0 0.0
        %521 = vmatpush1.msra.mxu0 %v426
        %522 = vmatprep.subr.mxu0 0.0
        %523 = vmatpush1.msra.mxu0 %v427
        %524 = vmatprep.subr.mxu0 0.0
        %525 = vmatpush1.msra.mxu0 %v428
        %526 = vmatprep.subr.mxu0 0.0
        %527 = vmatpush1.msra.mxu0 %v429
        %528 = vmatprep.subr.mxu0 0.0
        %529 = vmatpush1.msra.mxu0 %v430
        %530 = vmatprep.subr.mxu0 0.0
        %531 = vmatpush1.msra.mxu0 %v431
        %532 = vmatprep.subr.mxu0 0.0
        %533 = vmatpush1.msra.mxu0 %v432
        %534 = vmatprep.subr.mxu0 0.0
        %535 = vmatpush1.msra.mxu0 %v433
        %536 = vmatprep.subr.mxu0 0.0
        %537 = vmatpush1.msra.mxu0 %v434
        %538 = vmatprep.subr.mxu0 0.0
        %539 = vmatpush1.msra.mxu0 %v435
        %540 = vmatprep.subr.mxu0 0.0
        %541 = vmatpush1.msra.mxu0 %v436
        %542 = vmatprep.subr.mxu0 0.0
        %543 = vmatpush1.msra.mxu0 %v437
        %544 = vmatprep.subr.mxu0 0.0
        %545 = vmatpush1.msra.mxu0 %v438
        %546 = vmatprep.subr.mxu0 0.0
        %547 = vmatpush1.msra.mxu0 %v439
        %548 = vmatprep.subr.mxu0 0.0
        %549 = vmatpush1.msra.mxu0 %v440
        %550 = vmatprep.subr.mxu0 0.0
        %551 = vmatpush1.msra.mxu0 0.0
        %552 = vmatprep.subr.mxu0 0.0
        %553 = vmatpush1.msra.mxu0 0.0
        %554 = vmatprep.subr.mxu0 0.0
        %555 = vmatpush1.msra.mxu0 0.0
        %556 = vmatprep.subr.mxu0 0.0
        %557 = vmatpush1.msra.mxu0 0.0
        %558 = vmatprep.subr.mxu0 0.0
        %559 = vmatpush1.msra.mxu0 0.0
        %560 = vmatprep.subr.mxu0 0.0
        %561 = vmatpush1.msra.mxu0 0.0
        %562 = vmatprep.subr.mxu0 0.0
        %563 = vmatpush1.msra.mxu0 0.0
        %564 = vmatprep.subr.mxu0 0.0
        %565 = vmatpush1.msra.mxu0 0.0
        %566 = vmatprep.subr.mxu0 0.0
        %567 = vmatpush1.msra.mxu0 0.0
        %568 = vmatprep.subr.mxu0 0.0
        %569 = vmatpush1.msra.mxu0 0.0
        %570 = vmatprep.subr.mxu0 0.0
        %571 = vmatpush1.msra.mxu0 0.0
        %572 = vmatprep.subr.mxu0 0.0
        %573 = vmatpush1.msra.mxu0 0.0
        %574 = vmatprep.subr.mxu0 0.0
        %575 = vmatpush1.msra.mxu0 0.0
        %576 = vmatprep.subr.mxu0 0.0
        %577 = vmatpush1.msra.mxu0 0.0
        %578 = vmatprep.subr.mxu0 0.0
        %579 = vmatpush1.msra.mxu0 0.0
        %580 = vmatprep.subr.mxu0 0.0
        %581 = vmatpush1.msra.mxu0 0.0
        %582 = vmatprep.mubr.f32.mxu0 0.0
        %583 = vmatmul.mubr.f32.gmra.mrb[0].mxu0 %v392
        %v584 = vpop.f32.mrb[0].mxu0
        %v585 = vadd.f32 %v515, %v584
        %v586 = vpop.f32.mrb[0].mxu0
        %587 = vdwg.mxu0
        %v588 = vld [vmem:[%s5] sm:$0x1]
        %v590 = vlaneseq
        %v591 = vshrl.u32 %v590, 7
        %v592 = vsub.s32 0, %v591
        %v593 = vrot.slane %v588, %v592
        %v595 = vmul.f32 %v585, %v593
        %v596 = vld [vmem:[%s6] sm:$0x1]
        %v598 = vlaneseq
        %v599 = vshrl.u32 %v598, 7
        %v600 = vsub.s32 0, %v599
        %v601 = vrot.slane %v596, %v600
        %v603 = vadd.f32 %v595, %v601
        %v604 = vmax.f32 %v603, 0.0
        %v605 = vrot.slane %v604, 7
        %v606 = vsel %vm388, %v605, 0.0
        %v607 = vrot.slane %v604, 1
        %v608 = vsel %vm391, %v607, 0.0
        %v609 = vld [vmem:[#allocation5] sm:$0xff]
        %v610 = vld [vmem:[#allocation5 + $0x8] sm:$0xff]
        %v611 = vld [vmem:[#allocation5 + $0x10] sm:$0xff]
        %v612 = vld [vmem:[#allocation5 + $0x18] sm:$0xff]
        %v613 = vld [vmem:[#allocation5 + $0x20] sm:$0xff]
        %v614 = vld [vmem:[#allocation5 + $0x28] sm:$0xff]
        %v615 = vld [vmem:[#allocation5 + $0x30] sm:$0xff]
        %v616 = vld [vmem:[#allocation5 + $0x38] sm:$0xff]
        %v617 = vld [vmem:[#allocation5 + $0x40] sm:$0xff]
        %v618 = vld [vmem:[#allocation5 + $0x48] sm:$0xff]
        %v619 = vld [vmem:[#allocation5 + $0x50] sm:$0xff]
        %v620 = vld [vmem:[#allocation5 + $0x58] sm:$0xff]
        %v621 = vld [vmem:[#allocation5 + $0x60] sm:$0xff]
        %v622 = vld [vmem:[#allocation5 + $0x68] sm:$0xff]
        %v623 = vld [vmem:[#allocation5 + $0x70] sm:$0xff]
        %v624 = vld [vmem:[#allocation5 + $0x78] sm:$0xff]
        %v625 = vld [vmem:[#allocation5 + $0x80] sm:$0xff]
        %v626 = vld [vmem:[#allocation5 + $0x88] sm:$0xff]
        %v627 = vld [vmem:[#allocation5 + $0x90] sm:$0xff]
        %v628 = vld [vmem:[#allocation5 + $0x98] sm:$0xff]
        %v629 = vld [vmem:[#allocation5 + $0xa0] sm:$0xff]
        %v630 = vld [vmem:[#allocation5 + $0xa8] sm:$0xff]
        %v631 = vld [vmem:[#allocation5 + $0xb0] sm:$0xff]
        %v632 = vld [vmem:[#allocation5 + $0xb8] sm:$0xff]
        %v633 = vld [vmem:[#allocation5 + $0xc0] sm:$0xff]
        %v634 = vld [vmem:[#allocation5 + $0xc8] sm:$0xff]
        %v635 = vld [vmem:[#allocation5 + $0xd0] sm:$0xff]
        %v636 = vld [vmem:[#allocation5 + $0xd8] sm:$0xff]
        %v637 = vld [vmem:[#allocation5 + $0xe0] sm:$0xff]
        %v638 = vld [vmem:[#allocation5 + $0xe8] sm:$0xff]
        %v639 = vld [vmem:[#allocation5 + $0xf0] sm:$0xff]
        %v640 = vld [vmem:[#allocation5 + $0xf8] sm:$0xff]
        %v641 = vld [vmem:[#allocation5 + $0x100] sm:$0xff]
        %v642 = vld [vmem:[#allocation5 + $0x108] sm:$0xff]
        %v643 = vld [vmem:[#allocation5 + $0x110] sm:$0xff]
        %v644 = vld [vmem:[#allocation5 + $0x118] sm:$0xff]
        %v645 = vld [vmem:[#allocation5 + $0x120] sm:$0xff]
        %v646 = vld [vmem:[#allocation5 + $0x128] sm:$0xff]
        %v647 = vld [vmem:[#allocation5 + $0x130] sm:$0xff]
        %v648 = vld [vmem:[#allocation5 + $0x138] sm:$0xff]
        %v649 = vld [vmem:[#allocation5 + $0x140] sm:$0xff]
        %v650 = vld [vmem:[#allocation5 + $0x148] sm:$0xff]
        %v651 = vld [vmem:[#allocation5 + $0x150] sm:$0xff]
        %v652 = vld [vmem:[#allocation5 + $0x158] sm:$0xff]
        %v653 = vld [vmem:[#allocation5 + $0x160] sm:$0xff]
        %v654 = vld [vmem:[#allocation5 + $0x168] sm:$0xff]
        %v655 = vld [vmem:[#allocation5 + $0x170] sm:$0xff]
        %v656 = vld [vmem:[#allocation5 + $0x178] sm:$0xff]
        %v657 = vld [vmem:[%s8] sm:$0x1]
        %v659 = vlaneseq
        %v660 = vshrl.u32 %v659, 7
        %v661 = vsub.s32 0, %v660
        %v662 = vrot.slane %v657, %v661
        %664 = vmatprep.subr.mxu0 0.0
        %665 = vmatpush1.msra.mxu0 %v609
        %666 = vmatprep.subr.mxu0 0.0
        %667 = vmatpush1.msra.mxu0 %v610
        %668 = vmatprep.subr.mxu0 0.0
        %669 = vmatpush1.msra.mxu0 %v611
        %670 = vmatprep.subr.mxu0 0.0
        %671 = vmatpush1.msra.mxu0 %v612
        %672 = vmatprep.subr.mxu0 0.0
        %673 = vmatpush1.msra.mxu0 %v613
        %674 = vmatprep.subr.mxu0 0.0
        %675 = vmatpush1.msra.mxu0 %v614
        %676 = vmatprep.subr.mxu0 0.0
        %677 = vmatpush1.msra.mxu0 %v615
        %678 = vmatprep.subr.mxu0 0.0
        %679 = vmatpush1.msra.mxu0 %v616
        %680 = vmatprep.subr.mxu0 0.0
        %681 = vmatpush1.msra.mxu0 %v617
        %682 = vmatprep.subr.mxu0 0.0
        %683 = vmatpush1.msra.mxu0 %v618
        %684 = vmatprep.subr.mxu0 0.0
        %685 = vmatpush1.msra.mxu0 %v619
        %686 = vmatprep.subr.mxu0 0.0
        %687 = vmatpush1.msra.mxu0 %v620
        %688 = vmatprep.subr.mxu0 0.0
        %689 = vmatpush1.msra.mxu0 %v621
        %690 = vmatprep.subr.mxu0 0.0
        %691 = vmatpush1.msra.mxu0 %v622
        %692 = vmatprep.subr.mxu0 0.0
        %693 = vmatpush1.msra.mxu0 %v623
        %694 = vmatprep.subr.mxu0 0.0
        %695 = vmatpush1.msra.mxu0 %v624
        %696 = vmatprep.subr.mxu0 0.0
        %697 = vmatpush1.msra.mxu0 %v625
        %698 = vmatprep.subr.mxu0 0.0
        %699 = vmatpush1.msra.mxu0 %v626
        %700 = vmatprep.subr.mxu0 0.0
        %701 = vmatpush1.msra.mxu0 %v627
        %702 = vmatprep.subr.mxu0 0.0
        %703 = vmatpush1.msra.mxu0 %v628
        %704 = vmatprep.subr.mxu0 0.0
        %705 = vmatpush1.msra.mxu0 %v629
        %706 = vmatprep.subr.mxu0 0.0
        %707 = vmatpush1.msra.mxu0 %v630
        %708 = vmatprep.subr.mxu0 0.0
        %709 = vmatpush1.msra.mxu0 %v631
        %710 = vmatprep.subr.mxu0 0.0
        %711 = vmatpush1.msra.mxu0 %v632
        %712 = vmatprep.subr.mxu0 0.0
        %713 = vmatpush1.msra.mxu0 %v633
        %714 = vmatprep.subr.mxu0 0.0
        %715 = vmatpush1.msra.mxu0 %v634
        %716 = vmatprep.subr.mxu0 0.0
        %717 = vmatpush1.msra.mxu0 %v635
        %718 = vmatprep.subr.mxu0 0.0
        %719 = vmatpush1.msra.mxu0 %v636
        %720 = vmatprep.subr.mxu0 0.0
        %721 = vmatpush1.msra.mxu0 %v637
        %722 = vmatprep.subr.mxu0 0.0
        %723 = vmatpush1.msra.mxu0 %v638
        %724 = vmatprep.subr.mxu0 0.0
        %725 = vmatpush1.msra.mxu0 %v639
        %726 = vmatprep.subr.mxu0 0.0
        %727 = vmatpush1.msra.mxu0 %v640
        %728 = vmatprep.mubr.f32.mxu0 %v604
        %729 = vmatmul.mubr.f32.gmra.mrb[0].mxu0 %v606
        %v730 = vpop.f32.mrb[0].mxu0
        %v731 = vadd.f32 %v662, %v730
        %v732 = vpop.f32.mrb[0].mxu0
        %733 = vdwg.mxu0
        %734 = vmatprep.subr.mxu0 0.0
        %735 = vmatpush1.msra.mxu0 %v641
        %736 = vmatprep.subr.mxu0 0.0
        %737 = vmatpush1.msra.mxu0 %v642
        %738 = vmatprep.subr.mxu0 0.0
        %739 = vmatpush1.msra.mxu0 %v643
        %740 = vmatprep.subr.mxu0 0.0
        %741 = vmatpush1.msra.mxu0 %v644
        %742 = vmatprep.subr.mxu0 0.0
        %743 = vmatpush1.msra.mxu0 %v645
        %744 = vmatprep.subr.mxu0 0.0
        %745 = vmatpush1.msra.mxu0 %v646
        %746 = vmatprep.subr.mxu0 0.0
        %747 = vmatpush1.msra.mxu0 %v647
        %748 = vmatprep.subr.mxu0 0.0
        %749 = vmatpush1.msra.mxu0 %v648
        %750 = vmatprep.subr.mxu0 0.0
        %751 = vmatpush1.msra.mxu0 %v649
        %752 = vmatprep.subr.mxu0 0.0
        %753 = vmatpush1.msra.mxu0 %v650
        %754 = vmatprep.subr.mxu0 0.0
        %755 = vmatpush1.msra.mxu0 %v651
        %756 = vmatprep.subr.mxu0 0.0
        %757 = vmatpush1.msra.mxu0 %v652
        %758 = vmatprep.subr.mxu0 0.0
        %759 = vmatpush1.msra.mxu0 %v653
        %760 = vmatprep.subr.mxu0 0.0
        %761 = vmatpush1.msra.mxu0 %v654
        %762 = vmatprep.subr.mxu0 0.0
        %763 = vmatpush1.msra.mxu0 %v655
        %764 = vmatprep.subr.mxu0 0.0
        %765 = vmatpush1.msra.mxu0 %v656
        %766 = vmatprep.subr.mxu0 0.0
        %767 = vmatpush1.msra.mxu0 0.0
        %768 = vmatprep.subr.mxu0 0.0
        %769 = vmatpush1.msra.mxu0 0.0
        %770 = vmatprep.subr.mxu0 0.0
        %771 = vmatpush1.msra.mxu0 0.0
        %772 = vmatprep.subr.mxu0 0.0
        %773 = vmatpush1.msra.mxu0 0.0
        %774 = vmatprep.subr.mxu0 0.0
        %775 = vmatpush1.msra.mxu0 0.0
        %776 = vmatprep.subr.mxu0 0.0
        %777 = vmatpush1.msra.mxu0 0.0
        %778 = vmatprep.subr.mxu0 0.0
        %779 = vmatpush1.msra.mxu0 0.0
        %780 = vmatprep.subr.mxu0 0.0
        %781 = vmatpush1.msra.mxu0 0.0
        %782 = vmatprep.subr.mxu0 0.0
        %783 = vmatpush1.msra.mxu0 0.0
        %784 = vmatprep.subr.mxu0 0.0
        %785 = vmatpush1.msra.mxu0 0.0
        %786 = vmatprep.subr.mxu0 0.0
        %787 = vmatpush1.msra.mxu0 0.0
        %788 = vmatprep.subr.mxu0 0.0
        %789 = vmatpush1.msra.mxu0 0.0
        %790 = vmatprep.subr.mxu0 0.0
        %791 = vmatpush1.msra.mxu0 0.0
        %792 = vmatprep.subr.mxu0 0.0
        %793 = vmatpush1.msra.mxu0 0.0
        %794 = vmatprep.subr.mxu0 0.0
        %795 = vmatpush1.msra.mxu0 0.0
        %796 = vmatprep.subr.mxu0 0.0
        %797 = vmatpush1.msra.mxu0 0.0
        %798 = vmatprep.mubr.f32.mxu0 0.0
        %799 = vmatmul.mubr.f32.gmra.mrb[0].mxu0 %v608
        %v800 = vpop.f32.mrb[0].mxu0
        %v801 = vadd.f32 %v731, %v800
        %v802 = vpop.f32.mrb[0].mxu0
        %803 = vdwg.mxu0
        %v804 = vadd.f32 %v801, %v367
        %805 = vst [vmem:[%s355] sm:$0xff] %v804
        %s806 = sand.u32 %s227, 1
        %s807 = scalar_lea.sflag [#allocation4], %s806
        %s808 = sand.u32 %s227, 1
        %s809 = smul.addr %s808, 8
        %s810 = scalar_lea.vmem [#allocation7], %s809
        // Predicated region
        $region65: #{tpu_custom_call.1} parent=55 // pred_check
          %p811 = pneg %p237
        $region66: #{tpu_custom_call.1} parent=55 // pred_check_branch
          %813 = sbr.rel (%p811) target = $region68
        $region67: #{tpu_custom_call.1} parent=55 // pred_region
          %s815 = ssub.s32 128, 128
          %816 = vsyncadd %s807, %s815
          %s817 = smul.addr %s25, 128
          %s818 = scalar_lea.hbm %s9, %s817
          %s820 = sshll.u32 %s810, 4
          %s821 = int_to_ptr.vmem [resolvable:$true] %s820
          %823 = dma.vmem_to_hbm [thread:$0]  %s821, 128, %s818, %s807
        $region68: #{tpu_custom_call.1} parent=55 // pred_fallthru
          _
      $region56: #{tpu_custom_call.1} parent=5 // pred_fallthru
        _
      %p824 = scmp.le.s32.totalorder 2, %s20
      // Predicated region
      $region69: #{tpu_custom_call.1} parent=5 // pred_check
        %p825 = pneg %p824
      $region70: #{tpu_custom_call.1} parent=5 // pred_check_branch
        %827 = sbr.rel (%p825) target = $region72
      $region71: #{tpu_custom_call.1} parent=5 // pred_region
        %s828 = ssub.s32 %s20, 2
        // Predicated region
        $region73: #{tpu_custom_call.1} parent=71 // pred_check
          %p829 = pneg %p243
        $region74: #{tpu_custom_call.1} parent=71 // pred_check_branch
          %831 = sbr.rel (%p829) target = $region76
        $region75: #{tpu_custom_call.1} parent=71 // pred_region
          %s832 = sand.u32 %s228, 1
          %s833 = scalar_lea.sflag [#allocation4], %s832
          %s834 = sand.u32 %s228, 1
          %s835 = smul.addr %s834, 8
          %s836 = scalar_lea.vmem [#allocation7], %s835
          %837 = dma.done %s833, 128
        $region76: #{tpu_custom_call.1} parent=71 // pred_fallthru
          _
      $region72: #{tpu_custom_call.1} parent=5 // pred_fallthru
        _
    $region6: #{tpu_custom_call.1} parent=1 // loop_footer
      %s24 = sadd.s32 1, %s20
    $region7: #{tpu_custom_call.1} parent=1 // loop_footer_branch
      %19 = sbr.rel target = $region3
    $region8: #{tpu_custom_call.1} parent=1 // loop_exit
      _
    %838 = vsyncpa [#allocation3], 1
    %s839 = scalar_lea.sflag [#allocation3], 1
    %840 = vsyncpa %s839, 1
    %841 = vsyncpa [#allocation6], 1
    %842 = vsyncpa [#allocation4], 1
    %s843 = scalar_lea.sflag [#allocation4], 1
    %844 = vsyncpa %s843, 1

</llo_original>
